<compile_context>
chip_gen: v7x
topology: tpu7x:2x2x1
jax: 0.10.0
libtpu: 0.0.40
codegen_flags: <defaults>
</compile_context>

<pallas_src>
import jax
import jax.numpy as jnp
from jax.experimental import pallas as pl
from jax.experimental.pallas import tpu as pltpu


def _student_kernel(xT_ref, wb_ref, o_ref):
    # xT_ref: (D=2, B) f32 in VMEM  -- batch on the 128-wide lane axis
    # wb_ref: (6,)     f32 in SMEM  -- [w00, w01, w10, w11, b0, b1]
    # o_ref : (1, 1)   f32 in SMEM  -- scalar result
    x = xT_ref[...]          # single whole-tile load
    x0 = x[0:1, :]           # (1, B) feature 0 across the batch
    x1 = x[1:2, :]           # (1, B) feature 1 across the batch

    w00 = wb_ref[0]
    w01 = wb_ref[1]
    w10 = wb_ref[2]
    w11 = wb_ref[3]
    b0 = wb_ref[4]
    b1 = wb_ref[5]

    # Linear + ReLU per output channel, all on the VPU (scalar broadcasts).
    y0 = jnp.maximum(x0 * w00 + x1 * w01 + b0, 0.0)
    y1 = jnp.maximum(x0 * w10 + x1 * w11 + b1, 0.0)

    # Full reduction to a scalar (torch.sum over all elements) -> SMEM.
    o_ref[0, 0] = jnp.sum(y0 + y1)


def _student_pallas(xT, wb):
    return pl.pallas_call(
        _student_kernel,
        out_shape=jax.ShapeDtypeStruct((1, 1), jnp.float32),
        in_specs=[
            pl.BlockSpec(memory_space=pltpu.VMEM),   # xT: whole array in VMEM
            pl.BlockSpec(memory_space=pltpu.SMEM),   # wb: scalars in SMEM
        ],
        out_specs=pl.BlockSpec(memory_space=pltpu.SMEM),  # scalar result in SMEM
    )(xT, wb)


@jax.jit
def student_forward(x, w, b):
    """x: (B, D) f32 (PyTorch Linear input layout), w: (M, D), b: (M,) -> scalar f32."""
    B, D = x.shape
    M = w.shape[0]
    assert D == 2 and M == 2, "kernel is specialized to the module's fc = Linear(2, 2)"

    # Lane-dense layout: (D, B) so the batch sits on the 128-wide lane axis.
    xT = jnp.asarray(x, jnp.float32).T
    # Single SMEM scalar blob: [w00, w01, w10, w11, b0, b1]
    wb = jnp.concatenate(
        [jnp.asarray(w, jnp.float32).reshape(-1), jnp.asarray(b, jnp.float32).reshape(-1)]
    )
    return _student_pallas(xT, wb)[0, 0]


if __name__ == "__main__":
    key = jax.random.PRNGKey(0)
    kx, kw, kb = jax.random.split(key, 3)

    D = 2     # in_features  (= x.ndim of the reference tensor)
    M = 2     # out_features
    B = 128   # small batch, lane-dense (one full vreg lane width)

    # Deterministic parameter init (Linear-style uniform(-1/sqrt(D), 1/sqrt(D))).
    bound = 1.0 / jnp.sqrt(jnp.float32(D))
    w = jax.random.uniform(kw, (M, D), jnp.float32, -bound, bound)
    b = jax.random.uniform(kb, (M,), jnp.float32, -bound, bound)

    x = jax.random.normal(kx, (B, D), jnp.float32)

    out = student_forward(x, w, b)
    out = jax.block_until_ready(out)

    # Cross-check against a plain-JAX reference of the same math.
    ref = jnp.sum(jnp.maximum(x @ w.T + b, 0.0))
    assert jnp.allclose(out, ref, rtol=1e-5, atol=1e-5), (out, ref)

    print("KERNEL_OK")
</pallas_src>

<mosaic_0001>
module attributes {stable_mosaic.version = 11 : i64} {
  func.func @_student_kernel(%arg0: memref<2x128xf32, #tpu.memory_space<vmem>>, %arg1: memref<6xf32, #tpu.memory_space<smem>>, %arg2: memref<1x1xf32, #tpu.memory_space<smem>>) attributes {dimension_semantics = [], scalar_prefetch = 0 : i64, scratch_operands = 0 : i64, tpu.core_type = #tpu.core_type<tc>} {
    %c0 = arith.constant 0 : index
    %c0_0 = arith.constant 0 : index
    %0 = vector.load %arg0[%c0, %c0_0] : memref<2x128xf32, #tpu.memory_space<vmem>>, vector<2x128xf32>
    %1 = vector.extract_strided_slice %0 {offsets = [0, 0], sizes = [1, 128], strides = [1, 1]} : vector<2x128xf32> to vector<1x128xf32>
    %2 = vector.extract_strided_slice %0 {offsets = [1, 0], sizes = [1, 128], strides = [1, 1]} : vector<2x128xf32> to vector<1x128xf32>
    %c0_1 = arith.constant 0 : index
    %3 = memref.load %arg1[%c0_1] : memref<6xf32, #tpu.memory_space<smem>>
    %c1 = arith.constant 1 : index
    %4 = memref.load %arg1[%c1] : memref<6xf32, #tpu.memory_space<smem>>
    %c2 = arith.constant 2 : index
    %5 = memref.load %arg1[%c2] : memref<6xf32, #tpu.memory_space<smem>>
    %c3 = arith.constant 3 : index
    %6 = memref.load %arg1[%c3] : memref<6xf32, #tpu.memory_space<smem>>
    %c4 = arith.constant 4 : index
    %7 = memref.load %arg1[%c4] : memref<6xf32, #tpu.memory_space<smem>>
    %c5 = arith.constant 5 : index
    %8 = memref.load %arg1[%c5] : memref<6xf32, #tpu.memory_space<smem>>
    %9 = vector.broadcast %3 : f32 to vector<1x128xf32>
    %10 = arith.mulf %1, %9 : vector<1x128xf32>
    %11 = vector.broadcast %4 : f32 to vector<1x128xf32>
    %12 = arith.mulf %2, %11 : vector<1x128xf32>
    %13 = arith.addf %10, %12 : vector<1x128xf32>
    %14 = vector.broadcast %7 : f32 to vector<1x128xf32>
    %15 = arith.addf %13, %14 : vector<1x128xf32>
    %cst = arith.constant 0.000000e+00 : f32
    %16 = vector.broadcast %cst : f32 to vector<1x128xf32>
    %17 = arith.maximumf %15, %16 : vector<1x128xf32>
    %18 = vector.broadcast %5 : f32 to vector<1x128xf32>
    %19 = arith.mulf %1, %18 : vector<1x128xf32>
    %20 = vector.broadcast %6 : f32 to vector<1x128xf32>
    %21 = arith.mulf %2, %20 : vector<1x128xf32>
    %22 = arith.addf %19, %21 : vector<1x128xf32>
    %23 = vector.broadcast %8 : f32 to vector<1x128xf32>
    %24 = arith.addf %22, %23 : vector<1x128xf32>
    %cst_2 = arith.constant 0.000000e+00 : f32
    %25 = vector.broadcast %cst_2 : f32 to vector<1x128xf32>
    %26 = arith.maximumf %24, %25 : vector<1x128xf32>
    %27 = arith.addf %17, %26 : vector<1x128xf32>
    %28 = vector.shape_cast %27 : vector<1x128xf32> to vector<1x1x128xf32>
    %cst_3 = arith.constant dense<0.000000e+00> : vector<1xf32>
    %29 = vector.multi_reduction <add>, %28, %cst_3 [1, 2] : vector<1x1x128xf32> to vector<1xf32>
    %30 = vector.shape_cast %29 : vector<1xf32> to vector<1x1x1xf32>
    %31 = vector.extract %30[0, 0, 0] : f32 from vector<1x1x1xf32>
    %c0_4 = arith.constant 0 : index
    %c0_5 = arith.constant 0 : index
    %32 = memref.load %arg2[%c0_4, %c0_5] : memref<1x1xf32, #tpu.memory_space<smem>>
    memref.store %31, %arg2[%c0_4, %c0_5] : memref<1x1xf32, #tpu.memory_space<smem>>
    return
  }
}

</mosaic_0001>

<llo_original>
// kernel: student_forward.1
$region0: #{student_forward.1}
  #allocation0 [shape = 'u32[]', space=smem, size = 0x4, offset = 0x4, fixed_abs, tag = 'smem constant byte address 0x4 - core index']
  #allocation1 [shape = 'u32[144,128]{1,0:T(1,128)}', space=vmem, size = 0x12000, scoped, tag = 'internal scratch']
  %s0 = inlined_call_operand.vmem [shape: f32[2,128], index: 0, kind: input, shape index: {}]
  %s1 = inlined_call_operand.vmem [shape: f32[6], index: 1, kind: input, shape index: {}]
  %s2 = inlined_call_operand.hbm [shape: f32[1,1], index: 2, kind: output, shape index: {}]
  %s3 = sld [smem:[#allocation0]]
  $region22: #{student_forward.1} parent=0
    _
  %s5 = ssub.s32 1, %s3
  %s6 = scalar_select 0, %s5, %s3
  $region1: #{student_forward.1} parent=0
    #allocation2 [shape = 'u8[512]{0}', space=smem, size = 0x200, scoped, tag = 'input window, operand 1, single buffered']
    #allocation3 [shape = 's32[1]{0}', space=sflag, size = 0x4, scoped, tag = 'scoped memory for student_forward.1']
    #allocation4 [shape = 's32[1]{0}', space=sflag, size = 0x4, scoped, tag = 'scoped memory for student_forward.1']
    #allocation5 [shape = 'u8[512]{0}', space=smem, size = 0x200, scoped, tag = 'output window, operand 0, single buffered']
    %7 = vsyncpa [#allocation4], 0
    %8 = vsyncpa [#allocation3], 0
    // Predicated region
    $region2: #{student_forward.1} parent=1 // pred_check
      _
    $region3: #{student_forward.1} parent=1 // pred_check_branch
      %10 = sbr.rel (0) target = $region5
    $region4: #{student_forward.1} parent=1 // pred_region
      _
    $region5: #{student_forward.1} parent=1 // pred_fallthru
      _
    // Predicated region
    $region6: #{student_forward.1} parent=1 // pred_check
      _
    $region7: #{student_forward.1} parent=1 // pred_check_branch
      %12 = sbr.rel (0) target = $region9
    $region8: #{student_forward.1} parent=1 // pred_region
      %s14 = ssub.s32 16, 16
      %15 = vsyncadd [#allocation4], %s14
      %s17 = sshll.u32 %s1, 4
      %s18 = int_to_ptr.vmem [resolvable:$true] %s17
      %20 = dma.vmem_to_smem %s18, 16, [#allocation2], [#allocation4]
    $region9: #{student_forward.1} parent=1 // pred_fallthru
      _
    // Predicated region
    $region10: #{student_forward.1} parent=1 // pred_check
      _
    $region11: #{student_forward.1} parent=1 // pred_check_branch
      %22 = sbr.rel (0) target = $region13
    $region12: #{student_forward.1} parent=1 // pred_region
      %23 = dma.done [#allocation4], 16
    $region13: #{student_forward.1} parent=1 // pred_fallthru
      _
    %24 = sfence
    %v25 = vld [vmem:[%s0] sm:$0x3]
    %s26 = sld [smem:[#allocation2]]
    %s27 = sld [smem:[#allocation2 + $0x1]]
    %s28 = sld [smem:[#allocation2 + $0x2]]
    %s29 = sld [smem:[#allocation2 + $0x3]]
    %s30 = sld [smem:[#allocation2 + $0x4]]
    %s31 = sld [smem:[#allocation2 + $0x5]]
    %v32 = vstv %s26
    %v33 = vmul.f32 %v25, %v32
    %v34 = vstv %s27
    %v35 = vmul.f32 %v25, %v34
    %v37 = vrot.slane %v35, 1
    %v39 = vadd.f32 %v33, %v37
    %v40 = vstv %s30
    %v41 = vadd.f32 %v39, %v40
    %v42 = vmax.f32 %v41, 0.0
    %v43 = vstv %s28
    %v44 = vmul.f32 %v25, %v43
    %v45 = vstv %s29
    %v46 = vmul.f32 %v25, %v45
    %v48 = vrot.slane %v46, 1
    %v50 = vadd.f32 %v44, %v48
    %v51 = vstv %s31
    %v52 = vadd.f32 %v50, %v51
    %v53 = vmax.f32 %v52, 0.0
    %v54 = vadd.f32 %v42, %v53
    %vm55 = vcmask 1040384
    %v56 = vsel %vm55, %v54, 0.0
    %57 = vadd.xlane.f32.xlu0 %v56
    %v58 = vpop.xlane.xlu0 %57
    %v59 = vrot.slane %v58, 4
    %v60 = vadd.f32 %v58, %v59
    %v61 = vrot.slane %v60, 2
    %v62 = vadd.f32 %v60, %v61
    %v63 = vrot.slane %v62, 1
    %v64 = vadd.f32 %v62, %v63
    %s65 = vtos %v64
    %s66 = scalar_lea.smem [#allocation5], 0
    %67 = sst [smem:[%s66]] %s65
    // Predicated region
    $region14: #{student_forward.1} parent=1 // pred_check
      _
    $region15: #{student_forward.1} parent=1 // pred_check_branch
      %69 = sbr.rel (0) target = $region17
    $region16: #{student_forward.1} parent=1 // pred_region
      %s71 = ssub.s32 16, 16
      %72 = vsyncadd [#allocation3], %s71
      %75 = dma.smem_to_hbm [#allocation5], 16, %s2, [#allocation3]
    $region17: #{student_forward.1} parent=1 // pred_fallthru
      _
    // Predicated region
    $region18: #{student_forward.1} parent=1 // pred_check
      _
    $region19: #{student_forward.1} parent=1 // pred_check_branch
      %77 = sbr.rel (0) target = $region21
    $region20: #{student_forward.1} parent=1 // pred_region
      %78 = dma.done [#allocation3], 16
    $region21: #{student_forward.1} parent=1 // pred_fallthru
      _
    %79 = sfence
    %80 = vsyncpa [#allocation3], 1
    %81 = vsyncpa [#allocation4], 1

</llo_original>
